<compile_context>
chip_gen: v6e
topology: v6e:2x2x1
jax: 0.10.0
libtpu: 0.0.40
codegen_flags: <defaults>
</compile_context>

<pallas_src>
import math

import jax
import jax.numpy as jnp
from jax import lax
from jax.experimental import pallas as pl
from jax.experimental.pallas import tpu as pltpu


def _round_up(x, m):
    return (x + m - 1) // m * m


def _pick_tile(n_pad, target):
    """Largest divisor of n_pad that is <= target (n_pad is a multiple of 128,
    so the result is always a multiple of 128)."""
    t = min(target, n_pad)
    while n_pad % t:
        t //= 2
    return t


# ------------- Kernel A: support = d * (X @ W)  (tiny, single shot) ----------
def support_kernel(x_ref, w_ref, d_ref, o_ref):
    s = jnp.dot(x_ref[...], w_ref[...], preferred_element_type=jnp.float32)
    o_ref[...] = s * d_ref[...]          # fold left D^{-1/2} into support rows


# ------------- Kernel B: out = d_row * (A @ support) + bias  (tiled) ---------
def aggregate_kernel(adj_ref, s_ref, d_ref, b_ref, o_ref, acc_ref):
    k = pl.program_id(1)

    @pl.when(k == 0)
    def _():
        acc_ref[...] = jnp.zeros_like(acc_ref)

    # Adjacency is stored in bf16 (0/1/count values exact); cast up so the
    # aggregation matmul stays bit-level f32 math.
    acc_ref[...] += jnp.dot(adj_ref[...].astype(jnp.float32), s_ref[...],
                            preferred_element_type=jnp.float32)

    @pl.when(k == pl.num_programs(1) - 1)
    def _():
        # fold right D^{-1/2} into the output rows, fuse bias add + writeback
        o_ref[...] = acc_ref[...] * d_ref[...] + b_ref[...]


def my_graph_conv(x, adj_dense, weight, bias, *, tm_target=256, tk_target=512):
    """x: (N, F_in), adj_dense: (N, N) dense adjacency with diagonal already
    set per add_self_loops, weight: (F_in, F_out), bias: (F_out,) or None.
    Returns (N, F_out) float32."""
    n, f_in = x.shape
    f_out = weight.shape[1]

    n_pad = _round_up(n, 128)
    f_pad = _round_up(f_out, 128)
    tm = _pick_tile(n_pad, tm_target)
    tk = _pick_tile(n_pad, tk_target)

    # ---- glue (plain JAX): exact f32 degrees, padding, bf16 adjacency ----
    x = x.astype(jnp.float32)
    adj_f32 = adj_dense.astype(jnp.float32)
    deg = jnp.sum(adj_f32, axis=1)
    d = jnp.where(deg > 0.0, lax.rsqrt(jnp.maximum(deg, 1e-12)), 0.0)

    x_p = jnp.zeros((n_pad, f_in), jnp.float32).at[:n, :].set(x)
    w_p = jnp.zeros((f_in, f_pad), jnp.float32).at[:, :f_out].set(
        weight.astype(jnp.float32))
    b_p = jnp.zeros((1, f_pad), jnp.float32)
    if bias is not None:
        b_p = b_p.at[0, :f_out].set(bias.astype(jnp.float32))
    d_p = jnp.zeros((n_pad, 1), jnp.float32).at[:n, 0].set(d)
    adj_p = jnp.zeros((n_pad, n_pad), jnp.bfloat16).at[:n, :n].set(
        adj_f32.astype(jnp.bfloat16))

    # ---- Pallas kernel A: support = d * (X @ W), computed exactly once ----
    support = pl.pallas_call(
        support_kernel,
        out_shape=jax.ShapeDtypeStruct((n_pad, f_pad), jnp.float32),
        in_specs=[
            pl.BlockSpec(memory_space=pltpu.MemorySpace.VMEM),  # x
            pl.BlockSpec(memory_space=pltpu.MemorySpace.VMEM),  # w
            pl.BlockSpec(memory_space=pltpu.MemorySpace.VMEM),  # d
        ],
        out_specs=pl.BlockSpec(memory_space=pltpu.MemorySpace.VMEM),
    )(x_p, w_p, d_p)

    # ---- Pallas kernel B: tiled, pipelined out = d * (A @ support) + bias ----
    grid = (n_pad // tm, n_pad // tk)
    flops = 2 * n_pad * n_pad * f_pad
    bytes_accessed = (n_pad * n_pad * 2            # bf16 adjacency stream
                      + n_pad * f_pad * 4 * 2      # support in + output
                      + n_pad * 4 + f_pad * 4)     # d + bias

    out_p = pl.pallas_call(
        aggregate_kernel,
        out_shape=jax.ShapeDtypeStruct((n_pad, f_pad), jnp.float32),
        grid_spec=pltpu.PrefetchScalarGridSpec(
            num_scalar_prefetch=0,
            grid=grid,
            in_specs=[
                pl.BlockSpec((tm, tk), lambda i, k: (i, k)),      # adjacency
                pl.BlockSpec((tk, f_pad), lambda i, k: (k, 0)),   # support
                pl.BlockSpec((tm, 1), lambda i, k: (i, 0)),       # d rows
                pl.BlockSpec((1, f_pad), lambda i, k: (0, 0)),    # bias
            ],
            out_specs=pl.BlockSpec((tm, f_pad), lambda i, k: (i, 0)),
            scratch_shapes=[pltpu.VMEM((tm, f_pad), jnp.float32)],
        ),
        compiler_params=pltpu.CompilerParams(
            dimension_semantics=("parallel", "arbitrary"),
            vmem_limit_bytes=48 * 1024 * 1024,
        ),
        cost_estimate=pl.CostEstimate(
            flops=flops, transcendentals=0, bytes_accessed=bytes_accessed),
    )(adj_p, support, d_p, b_p)

    return out_p[:n, :f_out]


def build_dense_adj(edge_index, num_nodes, add_self_loops=True):
    """Glue (plain JAX): COO (2, E) int indices -> dense adjacency, duplicate
    edges summed (matches torch sparse_coo -> to_dense), diagonal forced to
    1 (self loops) or 0, like the PyTorch module."""
    # TODO(synk): sparse COO -> dense scatter has no clean Pallas equivalent;
    # done with jnp scatter-add glue (same as the module's cached build step).
    src, dst = edge_index[0], edge_index[1]
    adj = jnp.zeros((num_nodes, num_nodes), jnp.float32)
    adj = adj.at[src, dst].add(1.0)
    diag = jnp.arange(num_nodes)
    adj = adj.at[diag, diag].set(1.0 if add_self_loops else 0.0)
    return adj


if __name__ == "__main__":
    key = jax.random.PRNGKey(0)
    k_x, k_w, k_e = jax.random.split(key, 3)

    num_nodes = 32
    in_features = 16
    out_features = 8
    num_edges = 64

    # Node features
    x = jax.random.normal(k_x, (num_nodes, in_features), jnp.float32)

    # Deterministic "kaiming_uniform" style weight init (shape from __init__)
    bound = math.sqrt(6.0 / in_features)
    weight = jax.random.uniform(k_w, (in_features, out_features), jnp.float32,
                                minval=-bound, maxval=bound)
    bias = jnp.zeros((out_features,), jnp.float32)

    # Random COO edge index (2, E)
    edge_index = jax.random.randint(k_e, (2, num_edges), 0, num_nodes)
    adj_dense = build_dense_adj(edge_index, num_nodes, add_self_loops=True)

    out = my_graph_conv(x, adj_dense, weight, bias)
    out = jax.block_until_ready(out)

    # Pure-JAX reference check (A_norm materialized the naive way)
    deg = adj_dense.sum(axis=1)
    d = jnp.where(deg > 0, deg ** -0.5, 0.0)
    adj_n = d[:, None] * adj_dense * d[None, :]
    ref = adj_n @ (x @ weight) + bias

    assert out.shape == (num_nodes, out_features)
    assert jnp.allclose(out, ref, atol=1e-4, rtol=1e-4), \
        float(jnp.max(jnp.abs(out - ref)))

    print("KERNEL_OK")
</pallas_src>

<mosaic_0001>
module attributes {stable_mosaic.version = 11 : i64} {
  func.func @support_kernel(%arg0: memref<128x16xf32, #tpu.memory_space<vmem>>, %arg1: memref<16x128xf32, #tpu.memory_space<vmem>>, %arg2: memref<128x1xf32, #tpu.memory_space<vmem>>, %arg3: memref<128x128xf32, #tpu.memory_space<vmem>>) attributes {dimension_semantics = [], scalar_prefetch = 0 : i64, scratch_operands = 0 : i64, tpu.core_type = #tpu.core_type<tc>} {
    %c0 = arith.constant 0 : index
    %c0_0 = arith.constant 0 : index
    %0 = vector.load %arg0[%c0, %c0_0] : memref<128x16xf32, #tpu.memory_space<vmem>>, vector<128x16xf32>
    %c0_1 = arith.constant 0 : index
    %c0_2 = arith.constant 0 : index
    %1 = vector.load %arg1[%c0_1, %c0_2] : memref<16x128xf32, #tpu.memory_space<vmem>>, vector<16x128xf32>
    %cst = arith.constant dense<0.000000e+00> : vector<128x128xf32>
    %2 = tpu.matmul %0, %1, %cst {dimension_numbers = #tpu.dot_dimension_numbers<[1], [0], [0], [1], [0, 0, 1, 1], [], []>} : vector<128x16xf32>, vector<16x128xf32>, vector<128x128xf32> -> vector<128x128xf32>
    %c0_3 = arith.constant 0 : index
    %c0_4 = arith.constant 0 : index
    %3 = vector.load %arg2[%c0_3, %c0_4] : memref<128x1xf32, #tpu.memory_space<vmem>>, vector<128x1xf32>
    %4 = vector.broadcast %3 : vector<128x1xf32> to vector<128x128xf32>
    %5 = arith.mulf %2, %4 : vector<128x128xf32>
    %c0_5 = arith.constant 0 : index
    %c0_6 = arith.constant 0 : index
    %6 = vector.load %arg3[%c0_5, %c0_6] : memref<128x128xf32, #tpu.memory_space<vmem>>, vector<128x128xf32>
    tpu.vector_store %arg3[%c0_5, %c0_6], %5 {strides = array<i32>} : memref<128x128xf32, #tpu.memory_space<vmem>>, vector<128x128xf32>,
    return
  }
}

</mosaic_0001>

<llo_original>
// kernel: tpu_custom_call.1
$region0: #{tpu_custom_call.1}
  #allocation0 [shape = 'u32[]', space=smem, size = 0x4, offset = 0x4, fixed_abs, tag = 'smem constant byte address 0x4 - core index']
  #allocation1 [shape = 'u32[144,128]{1,0:T(1,128)}', space=vmem, size = 0x12000, scoped, tag = 'internal scratch']
  %s0 = inlined_call_operand.vmem [shape: f32[128,16], index: 0, kind: input, shape index: {}]
  %s1 = inlined_call_operand.vmem [shape: f32[16,128], index: 1, kind: input, shape index: {}]
  %s2 = inlined_call_operand.vmem [shape: f32[128,1], index: 2, kind: input, shape index: {}]
  %s3 = inlined_call_operand.hbm [shape: f32[128,128], index: 3, kind: output, shape index: {}]
  %s4 = sld [smem:[#allocation0]]
  $region22: #{tpu_custom_call.1} parent=0
    _
  %s6 = ssub.s32 1, %s4
  %s7 = scalar_select 0, %s6, %s4
  $region1: #{tpu_custom_call.1} parent=0
    #allocation2 [shape = 'u8[65536]{0}', space=vmem, size = 0x10000, scoped, tag = 'output window, operand 0, single buffered']
    #allocation3 [shape = 's32[1]{0}', space=sflag, size = 0x4, scoped, tag = 'scoped memory for tpu_custom_call.1']
    %8 = vsyncpa [#allocation3], 0
    // Predicated region
    $region2: #{tpu_custom_call.1} parent=1 // pred_check
      _
    $region3: #{tpu_custom_call.1} parent=1 // pred_check_branch
      %10 = sbr.rel (0) target = $region5
    $region4: #{tpu_custom_call.1} parent=1 // pred_region
      _
    $region5: #{tpu_custom_call.1} parent=1 // pred_fallthru
      _
    // Predicated region
    $region6: #{tpu_custom_call.1} parent=1 // pred_check
      _
    $region7: #{tpu_custom_call.1} parent=1 // pred_check_branch
      %12 = sbr.rel (0) target = $region9
    $region8: #{tpu_custom_call.1} parent=1 // pred_region
      _
    $region9: #{tpu_custom_call.1} parent=1 // pred_fallthru
      _
    // Predicated region
    $region10: #{tpu_custom_call.1} parent=1 // pred_check
      _
    $region11: #{tpu_custom_call.1} parent=1 // pred_check_branch
      %14 = sbr.rel (0) target = $region13
    $region12: #{tpu_custom_call.1} parent=1 // pred_region
      _
    $region13: #{tpu_custom_call.1} parent=1 // pred_fallthru
      _
    %v15 = vld [vmem:[%s0] sm:$0xff]
    %v16 = vld [vmem:[%s0 + $0x8] sm:$0xff]
    %v17 = vld [vmem:[%s0 + $0x10] sm:$0xff]
    %v18 = vld [vmem:[%s0 + $0x18] sm:$0xff]
    %v19 = vld [vmem:[%s0 + $0x20] sm:$0xff]
    %v20 = vld [vmem:[%s0 + $0x28] sm:$0xff]
    %v21 = vld [vmem:[%s0 + $0x30] sm:$0xff]
    %v22 = vld [vmem:[%s0 + $0x38] sm:$0xff]
    %v23 = vld [vmem:[%s0 + $0x40] sm:$0xff]
    %v24 = vld [vmem:[%s0 + $0x48] sm:$0xff]
    %v25 = vld [vmem:[%s0 + $0x50] sm:$0xff]
    %v26 = vld [vmem:[%s0 + $0x58] sm:$0xff]
    %v27 = vld [vmem:[%s0 + $0x60] sm:$0xff]
    %v28 = vld [vmem:[%s0 + $0x68] sm:$0xff]
    %v29 = vld [vmem:[%s0 + $0x70] sm:$0xff]
    %v30 = vld [vmem:[%s0 + $0x78] sm:$0xff]
    %v31 = vld [vmem:[%s1] sm:$0xff]
    %v32 = vld [vmem:[%s1 + $0x8] sm:$0xff]
    %vm33 = vcmask 130048
    %v35 = vsel %vm33, %v15, 0
    %v38 = vsel %vm33, %v16, 0
    %v41 = vsel %vm33, %v17, 0
    %v44 = vsel %vm33, %v18, 0
    %v47 = vsel %vm33, %v19, 0
    %v50 = vsel %vm33, %v20, 0
    %v53 = vsel %vm33, %v21, 0
    %v56 = vsel %vm33, %v22, 0
    %v59 = vsel %vm33, %v23, 0
    %v62 = vsel %vm33, %v24, 0
    %v65 = vsel %vm33, %v25, 0
    %v68 = vsel %vm33, %v26, 0
    %v71 = vsel %vm33, %v27, 0
    %v74 = vsel %vm33, %v28, 0
    %v77 = vsel %vm33, %v29, 0
    %v80 = vsel %vm33, %v30, 0
    %82 = vmatprep.subr.mxu0 0.0
    %83 = vmatpush1.msra.mxu0 0.0
    %84 = vmatprep.subr.mxu0 0.0
    %85 = vmatpush1.msra.mxu0 0.0
    %86 = vmatprep.subr.mxu0 0.0
    %87 = vmatpush1.msra.mxu0 0.0
    %88 = vmatprep.subr.mxu0 0.0
    %89 = vmatpush1.msra.mxu0 0.0
    %90 = vmatprep.subr.mxu0 0.0
    %91 = vmatpush1.msra.mxu0 0.0
    %92 = vmatprep.subr.mxu0 0.0
    %93 = vmatpush1.msra.mxu0 0.0
    %94 = vmatprep.subr.mxu0 0.0
    %95 = vmatpush1.msra.mxu0 0.0
    %96 = vmatprep.subr.mxu0 0.0
    %97 = vmatpush1.msra.mxu0 0.0
    %98 = vmatprep.subr.mxu0 0.0
    %99 = vmatpush1.msra.mxu0 0.0
    %100 = vmatprep.subr.mxu0 0.0
    %101 = vmatpush1.msra.mxu0 0.0
    %102 = vmatprep.subr.mxu0 0.0
    %103 = vmatpush1.msra.mxu0 0.0
    %104 = vmatprep.subr.mxu0 0.0
    %105 = vmatpush1.msra.mxu0 0.0
    %106 = vmatprep.subr.mxu0 0.0
    %107 = vmatpush1.msra.mxu0 0.0
    %108 = vmatprep.subr.mxu0 0.0
    %109 = vmatpush1.msra.mxu0 0.0
    %110 = vmatprep.subr.mxu0 0.0
    %111 = vmatpush1.msra.mxu0 %v32
    %112 = vmatprep.subr.mxu0 0.0
    %113 = vmatpush1.msra.mxu0 %v31
    %114 = vmatprep.subr.mxu0 0.0
    %115 = vmatpush2.msra.mxu0 0.0
    %116 = vmatprep.subr.mxu0 0.0
    %117 = vmatpush2.msra.mxu0 0.0
    %118 = vmatprep.subr.mxu0 0.0
    %119 = vmatpush2.msra.mxu0 0.0
    %120 = vmatprep.subr.mxu0 0.0
    %121 = vmatpush2.msra.mxu0 0.0
    %122 = vmatprep.subr.mxu0 0.0
    %123 = vmatpush2.msra.mxu0 0.0
    %124 = vmatprep.subr.mxu0 0.0
    %125 = vmatpush2.msra.mxu0 0.0
    %126 = vmatprep.subr.mxu0 0.0
    %127 = vmatpush2.msra.mxu0 0.0
    %128 = vmatprep.subr.mxu0 0.0
    %129 = vmatpush2.msra.mxu0 0.0
    %130 = vmatprep.subr.mxu0 0.0
    %131 = vmatpush2.msra.mxu0 0.0
    %132 = vmatprep.subr.mxu0 0.0
    %133 = vmatpush2.msra.mxu0 0.0
    %134 = vmatprep.subr.mxu0 0.0
    %135 = vmatpush2.msra.mxu0 0.0
    %136 = vmatprep.subr.mxu0 0.0
    %137 = vmatpush2.msra.mxu0 0.0
    %138 = vmatprep.subr.mxu0 0.0
    %139 = vmatpush2.msra.mxu0 0.0
    %140 = vmatprep.subr.mxu0 0.0
    %141 = vmatpush2.msra.mxu0 0.0
    %142 = vmatprep.subr.mxu0 0.0
    %143 = vmatpush2.msra.mxu0 0.0
    %144 = vmatprep.subr.mxu0 0.0
    %145 = vmatpush2.msra.mxu0 0.0
    %146 = vmatprep.mubr.f32.mxu0 0.0
    %147 = vmatmul.mubr.f32.gmra.mxu0 %v35
    %v148 = vpop.f32.mrf.mxu0
    %v149 = vadd.f32 0.0, %v148
    %v150 = vpop.f32.mrf.mxu0
    %151 = vmatprep.mubr.f32.mxu0 0.0
    %152 = vmatmul.mubr.f32.gmra.mxu0 %v38
    %v153 = vpop.f32.mrf.mxu0
    %v154 = vadd.f32 0.0, %v153
    %v155 = vpop.f32.mrf.mxu0
    %156 = vmatprep.mubr.f32.mxu0 0.0
    %157 = vmatmul.mubr.f32.gmra.mxu0 %v41
    %v158 = vpop.f32.mrf.mxu0
    %v159 = vadd.f32 0.0, %v158
    %v160 = vpop.f32.mrf.mxu0
    %161 = vmatprep.mubr.f32.mxu0 0.0
    %162 = vmatmul.mubr.f32.gmra.mxu0 %v44
    %v163 = vpop.f32.mrf.mxu0
    %v164 = vadd.f32 0.0, %v163
    %v165 = vpop.f32.mrf.mxu0
    %166 = vmatprep.mubr.f32.mxu0 0.0
    %167 = vmatmul.mubr.f32.gmra.mxu0 %v47
    %v168 = vpop.f32.mrf.mxu0
    %v169 = vadd.f32 0.0, %v168
    %v170 = vpop.f32.mrf.mxu0
    %171 = vmatprep.mubr.f32.mxu0 0.0
    %172 = vmatmul.mubr.f32.gmra.mxu0 %v50
    %v173 = vpop.f32.mrf.mxu0
    %v174 = vadd.f32 0.0, %v173
    %v175 = vpop.f32.mrf.mxu0
    %176 = vmatprep.mubr.f32.mxu0 0.0
    %177 = vmatmul.mubr.f32.gmra.mxu0 %v53
    %v178 = vpop.f32.mrf.mxu0
    %v179 = vadd.f32 0.0, %v178
    %v180 = vpop.f32.mrf.mxu0
    %181 = vmatprep.mubr.f32.mxu0 0.0
    %182 = vmatmul.mubr.f32.gmra.mxu0 %v56
    %v183 = vpop.f32.mrf.mxu0
    %v184 = vadd.f32 0.0, %v183
    %v185 = vpop.f32.mrf.mxu0
    %186 = vmatprep.mubr.f32.mxu0 0.0
    %187 = vmatmul.mubr.f32.gmra.mxu0 %v59
    %v188 = vpop.f32.mrf.mxu0
    %v189 = vadd.f32 0.0, %v188
    %v190 = vpop.f32.mrf.mxu0
    %191 = vmatprep.mubr.f32.mxu0 0.0
    %192 = vmatmul.mubr.f32.gmra.mxu0 %v62
    %v193 = vpop.f32.mrf.mxu0
    %v194 = vadd.f32 0.0, %v193
    %v195 = vpop.f32.mrf.mxu0
    %196 = vmatprep.mubr.f32.mxu0 0.0
    %197 = vmatmul.mubr.f32.gmra.mxu0 %v65
    %v198 = vpop.f32.mrf.mxu0
    %v199 = vadd.f32 0.0, %v198
    %v200 = vpop.f32.mrf.mxu0
    %201 = vmatprep.mubr.f32.mxu0 0.0
    %202 = vmatmul.mubr.f32.gmra.mxu0 %v68
    %v203 = vpop.f32.mrf.mxu0
    %v204 = vadd.f32 0.0, %v203
    %v205 = vpop.f32.mrf.mxu0
    %206 = vmatprep.mubr.f32.mxu0 0.0
    %207 = vmatmul.mubr.f32.gmra.mxu0 %v71
    %v208 = vpop.f32.mrf.mxu0
    %v209 = vadd.f32 0.0, %v208
    %v210 = vpop.f32.mrf.mxu0
    %211 = vmatprep.mubr.f32.mxu0 0.0
    %212 = vmatmul.mubr.f32.gmra.mxu0 %v74
    %v213 = vpop.f32.mrf.mxu0
    %v214 = vadd.f32 0.0, %v213
    %v215 = vpop.f32.mrf.mxu0
    %216 = vmatprep.mubr.f32.mxu0 0.0
    %217 = vmatmul.mubr.f32.gmra.mxu0 %v77
    %v218 = vpop.f32.mrf.mxu0
    %v219 = vadd.f32 0.0, %v218
    %v220 = vpop.f32.mrf.mxu0
    %221 = vmatprep.mubr.f32.mxu0 0.0
    %222 = vmatmul.mubr.f32.gmra.mxu0 %v80
    %v223 = vpop.f32.mrf.mxu0
    %v224 = vadd.f32 0.0, %v223
    %v225 = vpop.f32.mrf.mxu0
    %226 = vdwg.mxu0
    %v227 = vld [vmem:[%s2] sm:$0xff]
    %v228 = vld [vmem:[%s2 + $0x8] sm:$0xff]
    %v229 = vld [vmem:[%s2 + $0x10] sm:$0xff]
    %v230 = vld [vmem:[%s2 + $0x18] sm:$0xff]
    %v231 = vld [vmem:[%s2 + $0x20] sm:$0xff]
    %v232 = vld [vmem:[%s2 + $0x28] sm:$0xff]
    %v233 = vld [vmem:[%s2 + $0x30] sm:$0xff]
    %v234 = vld [vmem:[%s2 + $0x38] sm:$0xff]
    %v235 = vld [vmem:[%s2 + $0x40] sm:$0xff]
    %v236 = vld [vmem:[%s2 + $0x48] sm:$0xff]
    %v237 = vld [vmem:[%s2 + $0x50] sm:$0xff]
    %v238 = vld [vmem:[%s2 + $0x58] sm:$0xff]
    %v239 = vld [vmem:[%s2 + $0x60] sm:$0xff]
    %v240 = vld [vmem:[%s2 + $0x68] sm:$0xff]
    %v241 = vld [vmem:[%s2 + $0x70] sm:$0xff]
    %v242 = vld [vmem:[%s2 + $0x78] sm:$0xff]
    %244 = vset.pattern.permute.xlu0 0
    %245 = vperm.xlu0 %244, %v227
    %v246 = vpop.permute.xlu0 %245
    %249 = vset.pattern.permute.xlu0 0
    %250 = vperm.xlu0 %249, %v228
    %v251 = vpop.permute.xlu0 %250
    %254 = vset.pattern.permute.xlu0 0
    %255 = vperm.xlu0 %254, %v229
    %v256 = vpop.permute.xlu0 %255
    %259 = vset.pattern.permute.xlu0 0
    %260 = vperm.xlu0 %259, %v230
    %v261 = vpop.permute.xlu0 %260
    %264 = vset.pattern.permute.xlu0 0
    %265 = vperm.xlu0 %264, %v231
    %v266 = vpop.permute.xlu0 %265
    %269 = vset.pattern.permute.xlu0 0
    %270 = vperm.xlu0 %269, %v232
    %v271 = vpop.permute.xlu0 %270
    %274 = vset.pattern.permute.xlu0 0
    %275 = vperm.xlu0 %274, %v233
    %v276 = vpop.permute.xlu0 %275
    %279 = vset.pattern.permute.xlu0 0
    %280 = vperm.xlu0 %279, %v234
    %v281 = vpop.permute.xlu0 %280
    %284 = vset.pattern.permute.xlu0 0
    %285 = vperm.xlu0 %284, %v235
    %v286 = vpop.permute.xlu0 %285
    %289 = vset.pattern.permute.xlu0 0
    %290 = vperm.xlu0 %289, %v236
    %v291 = vpop.permute.xlu0 %290
    %294 = vset.pattern.permute.xlu0 0
    %295 = vperm.xlu0 %294, %v237
    %v296 = vpop.permute.xlu0 %295
    %299 = vset.pattern.permute.xlu0 0
    %300 = vperm.xlu0 %299, %v238
    %v301 = vpop.permute.xlu0 %300
    %304 = vset.pattern.permute.xlu0 0
    %305 = vperm.xlu0 %304, %v239
    %v306 = vpop.permute.xlu0 %305
    %309 = vset.pattern.permute.xlu0 0
    %310 = vperm.xlu0 %309, %v240
    %v311 = vpop.permute.xlu0 %310
    %314 = vset.pattern.permute.xlu0 0
    %315 = vperm.xlu0 %314, %v241
    %v316 = vpop.permute.xlu0 %315
    %319 = vset.pattern.permute.xlu0 0
    %320 = vperm.xlu0 %319, %v242
    %v321 = vpop.permute.xlu0 %320
    %v323 = vmul.f32 %v149, %v246
    %v324 = vmul.f32 %v154, %v251
    %v325 = vmul.f32 %v159, %v256
    %v326 = vmul.f32 %v164, %v261
    %v327 = vmul.f32 %v169, %v266
    %v328 = vmul.f32 %v174, %v271
    %v329 = vmul.f32 %v179, %v276
    %v330 = vmul.f32 %v184, %v281
    %v331 = vmul.f32 %v189, %v286
    %v332 = vmul.f32 %v194, %v291
    %v333 = vmul.f32 %v199, %v296
    %v334 = vmul.f32 %v204, %v301
    %v335 = vmul.f32 %v209, %v306
    %v336 = vmul.f32 %v214, %v311
    %v337 = vmul.f32 %v219, %v316
    %v338 = vmul.f32 %v224, %v321
    %339 = vst [vmem:[#allocation2] sm:$0xff] %v323
    %340 = vst [vmem:[#allocation2 + $0x8] sm:$0xff] %v324
    %341 = vst [vmem:[#allocation2 + $0x10] sm:$0xff] %v325
    %342 = vst [vmem:[#allocation2 + $0x18] sm:$0xff] %v326
    %343 = vst [vmem:[#allocation2 + $0x20] sm:$0xff] %v327
    %344 = vst [vmem:[#allocation2 + $0x28] sm:$0xff] %v328
    %345 = vst [vmem:[#allocation2 + $0x30] sm:$0xff] %v329
    %346 = vst [vmem:[#allocation2 + $0x38] sm:$0xff] %v330
    %347 = vst [vmem:[#allocation2 + $0x40] sm:$0xff] %v331
    %348 = vst [vmem:[#allocation2 + $0x48] sm:$0xff] %v332
    %349 = vst [vmem:[#allocation2 + $0x50] sm:$0xff] %v333
    %350 = vst [vmem:[#allocation2 + $0x58] sm:$0xff] %v334
    %351 = vst [vmem:[#allocation2 + $0x60] sm:$0xff] %v335
    %352 = vst [vmem:[#allocation2 + $0x68] sm:$0xff] %v336
    %353 = vst [vmem:[#allocation2 + $0x70] sm:$0xff] %v337
    %354 = vst [vmem:[#allocation2 + $0x78] sm:$0xff] %v338
    // Predicated region
    $region14: #{tpu_custom_call.1} parent=1 // pred_check
      _
    $region15: #{tpu_custom_call.1} parent=1 // pred_check_branch
      %356 = sbr.rel (0) target = $region17
    $region16: #{tpu_custom_call.1} parent=1 // pred_region
      %s358 = ssub.s32 2048, 2048
      %359 = vsyncadd [#allocation3], %s358
      %s360 = sshll.u32 [#allocation2], 4
      %s361 = int_to_ptr.vmem [resolvable:$true] %s360
      %366 = dma.vmem_to_hbm [thread:$0]  %s361, 2048, %s3, [#allocation3], 128, 128, 8
    $region17: #{tpu_custom_call.1} parent=1 // pred_fallthru
      _
    // Predicated region
    $region18: #{tpu_custom_call.1} parent=1 // pred_check
      _
    $region19: #{tpu_custom_call.1} parent=1 // pred_check_branch
      %368 = sbr.rel (0) target = $region21
    $region20: #{tpu_custom_call.1} parent=1 // pred_region
      %369 = dma.done [#allocation3], 2048
    $region21: #{tpu_custom_call.1} parent=1 // pred_fallthru
      _
    %370 = vsyncpa [#allocation3], 1

</llo_original>
